<compile_context>
chip_gen: v7x
topology: tpu7x:2x2x1
jax: 0.10.0
libtpu: 0.0.40
codegen_flags: <defaults>
</compile_context>

<pallas_src>
import functools

import jax
import jax.numpy as jnp
from jax.experimental import pallas as pl
from jax.experimental.pallas import tpu as pltpu


def _attention_kernel(x_ref, wqkv_ref, o_ref, *, masked):
    bb, T, Cp = x_ref.shape                      # block: (bb, T, Cp), Cp % 128 == 0
    cdt = x_ref.dtype                            # MXU operand dtype (bf16 common case)

    # ---- fused QKV projection: one MXU matmul over all bb*T rows ----------
    x2 = x_ref[...].reshape(bb * T, Cp)          # leading-dim merge (tiling-exact)
    qkv = jnp.dot(x2, wqkv_ref[...], preferred_element_type=jnp.float32)
    qkv = qkv.reshape(bb, T, 3 * Cp)             # (bb, T, 3Cp), f32 accumulator

    # Softmax scale is already folded into Wq in the wrapper; slices below are
    # 128-lane aligned because Cp is a multiple of 128.  Cast back to the
    # input dtype so the attention matmuls run at bf16 MXU throughput.
    q = qkv[..., :Cp].astype(cdt)
    k = qkv[..., Cp:2 * Cp].astype(cdt)
    v = qkv[..., 2 * Cp:].astype(cdt)

    # ---- scores: contract channel axes directly (no in-kernel transpose) --
    s = jnp.einsum("btc,bsc->bts", q, k,
                   preferred_element_type=jnp.float32)          # (bb, T, T) f32

    if masked:
        row = jax.lax.broadcasted_iota(jnp.int32, (T, T), 0)
        col = jax.lax.broadcasted_iota(jnp.int32, (T, T), 1)
        s = jnp.where((col <= row)[None, :, :], s, jnp.float32(-1e30))

    # ---- numerically-stable softmax; normalize AFTER the value matmul -----
    m = jnp.max(s, axis=-1, keepdims=True)
    e = jnp.exp(s - m)
    d = jnp.sum(e, axis=-1, keepdims=True)
    inv = pl.reciprocal(d, approx=True)          # EUP slot, essentially free
    inv = inv * (2.0 - d * inv)                  # one Newton step -> f32 accuracy

    out = jnp.einsum("bts,bsc->btc", e.astype(cdt), v,
                     preferred_element_type=jnp.float32)        # (bb, T, Cp) f32
    o_ref[...] = (out * inv).astype(o_ref.dtype)


def _vmem_budget_bytes():
    """Per-generation scoped-VMEM target, leaving headroom below physical."""
    cap = 64 * 1024 * 1024
    try:
        info = pltpu.get_tpu_info()
        cap = int(getattr(info, "vmem_capacity_bytes", cap))
    except Exception:
        pass
    if cap <= 64 * 1024 * 1024:
        return 48 * 1024 * 1024                  # v7x-class: 64 MiB physical per TC
    return 100 * 1024 * 1024                     # v5e / v6e: 128 MiB physical


def _pick_batch_block(B, T, Cp, itemsize, vmem_budget):
    """Batch rows per grid step, bounded by the in-kernel VMEM footprint."""
    if T % 8 != 0:
        return 1                                 # keep the (bb,T,Cp)->(bb*T,Cp) merge tiling-exact
    per_bb = (2 * 2 * T * Cp * itemsize          # x + out blocks, double-buffered
              + 3 * T * Cp * 4                   # qkv f32 accumulator
              + 3 * T * Cp * itemsize            # q / k / v in compute dtype
              + 2 * T * T * 4                    # scores + exp (f32)
              + T * T * itemsize                 # exp cast for the value matmul
              + T * Cp * 4)                      # f32 output before downcast
    weight_bytes = 2 * Cp * 3 * Cp * itemsize    # fused weight, double-buffered
    avail = max(vmem_budget - weight_bytes, per_bb)
    bb = max(1, min(B, avail // per_bb, max(1, 1024 // T)))
    if B >= 2:
        bb = min(bb, max(1, B // 2))             # >= 2 grid steps: both v7x TCs busy
    while B % bb:
        bb -= 1
    return max(1, bb)


def attention_forward(x, wq, wk, wv, *, masked=None):
    """x: (B, T, C) with C == heads; wq/wk/wv: (C, C) PyTorch-layout (out, in)."""
    B, T, C = x.shape
    heads = C
    is_masked = bool(masked) if masked is not None else False

    # Pad channels to a multiple of 128 lanes: lane-dense loads/stores and
    # 128-aligned q/k/v slices.  Padded weight rows/cols are zero, so padded
    # q/k contribute 0 to the scores and padded v columns are exactly 0.
    Cp = ((C + 127) // 128) * 128
    scale = jnp.float32(heads) ** -0.5
    w = jnp.zeros((Cp, 3 * Cp), jnp.float32)
    w = w.at[:C, 0 * Cp:0 * Cp + C].set((wq.astype(jnp.float32) * scale).T)
    w = w.at[:C, 1 * Cp:1 * Cp + C].set(wk.astype(jnp.float32).T)
    w = w.at[:C, 2 * Cp:2 * Cp + C].set(wv.astype(jnp.float32).T)
    w_qkv = w.astype(x.dtype)                    # (Cp, 3Cp), fed in the input dtype

    x_p = x if Cp == C else jnp.pad(x, ((0, 0), (0, 0), (0, Cp - C)))

    itemsize = jnp.dtype(x.dtype).itemsize
    budget = _vmem_budget_bytes()
    bb = _pick_batch_block(B, T, Cp, itemsize, budget)
    grid = (B // bb,)

    kernel = functools.partial(_attention_kernel, masked=is_masked)

    out = pl.pallas_call(
        kernel,
        out_shape=jax.ShapeDtypeStruct((B, T, Cp), x.dtype),
        grid_spec=pltpu.PrefetchScalarGridSpec(
            num_scalar_prefetch=0,
            grid=grid,
            in_specs=[
                pl.BlockSpec((bb, T, Cp), lambda b: (b, 0, 0)),
                pl.BlockSpec((Cp, 3 * Cp), lambda b: (0, 0)),
            ],
            out_specs=pl.BlockSpec((bb, T, Cp), lambda b: (b, 0, 0)),
        ),
        compiler_params=pltpu.CompilerParams(
            dimension_semantics=("parallel",),
            vmem_limit_bytes=int(budget),
        ),
    )(x_p, w_qkv)

    return out if Cp == C else out[..., :C]


def _reference(x, wq, wk, wv, masked):
    # Pure-JAX transcription of the PyTorch forward, for correctness checking.
    q = x @ wq.T
    k = x @ wk.T
    v = x @ wv.T
    C = x.shape[-1]
    w = (q @ jnp.swapaxes(k, -1, -2)) * (C ** -0.5)
    if masked:
        T = x.shape[1]
        tril = jnp.tril(jnp.ones((T, T)))
        w = jnp.where(tril == 0, -jnp.inf, w)
    w = jax.nn.softmax(w, axis=2)
    return w @ v


if __name__ == "__main__":
    B, T, heads = 2, 8, 32  # C == heads
    key = jax.random.PRNGKey(0)
    kx, kq, kk, kv = jax.random.split(key, 4)

    x = jax.random.normal(kx, (B, T, heads), dtype=jnp.float32)
    bound = 1.0 / (heads ** 0.5)  # nn.Linear default init range
    wq = jax.random.uniform(kq, (heads, heads), jnp.float32, -bound, bound)
    wk = jax.random.uniform(kk, (heads, heads), jnp.float32, -bound, bound)
    wv = jax.random.uniform(kv, (heads, heads), jnp.float32, -bound, bound)

    # f32 path: unmasked and causal-masked variants against the exact reference.
    out_plain = attention_forward(x, wq, wk, wv, masked=None)
    out_masked = attention_forward(x, wq, wk, wv, masked=True)
    jax.block_until_ready((out_plain, out_masked))

    ref_plain = _reference(x, wq, wk, wv, masked=False)
    ref_masked = _reference(x, wq, wk, wv, masked=True)

    assert jnp.allclose(out_plain, ref_plain, atol=2e-5, rtol=2e-5)
    assert jnp.allclose(out_masked, ref_masked, atol=2e-5, rtol=2e-5)

    # bf16 path: attention matmuls run as bf16 MXU ops with f32 accumulation.
    xb = x.astype(jnp.bfloat16)
    wqb = wq.astype(jnp.bfloat16)
    wkb = wk.astype(jnp.bfloat16)
    wvb = wv.astype(jnp.bfloat16)
    out_bf16 = attention_forward(xb, wqb, wkb, wvb, masked=True)
    jax.block_until_ready(out_bf16)
    assert jnp.allclose(out_bf16.astype(jnp.float32), ref_masked,
                        atol=7.5e-2, rtol=7.5e-2)

    print("KERNEL_OK")
</pallas_src>

<mosaic_0001>
module attributes {stable_mosaic.version = 11 : i64} {
  func.func @_attention_kernel(%arg0: i32, %arg1: memref<1x8x128xf32, #tpu.memory_space<vmem>>, %arg2: memref<128x384xf32, #tpu.memory_space<vmem>>, %arg3: memref<1x8x128xf32, #tpu.memory_space<vmem>>) attributes {dimension_semantics = [#tpu.dimension_semantics<parallel>], iteration_bounds = array<i64: 2>, scalar_prefetch = 0 : i64, scratch_operands = 0 : i64, tpu.core_type = #tpu.core_type<tc>, window_params = [{transform_indices = @transform_0, window_bounds = array<i64: 1, 8, 128>}, {pipeline_mode = #tpu.pipeline_mode<synchronous>, transform_indices = @transform_1, window_bounds = array<i64: 128, 384>}, {transform_indices = @transform_2, window_bounds = array<i64: 1, 8, 128>}]} {
    %c0 = arith.constant 0 : index
    %c0_0 = arith.constant 0 : index
    %c0_1 = arith.constant 0 : index
    %0 = vector.load %arg1[%c0, %c0_0, %c0_1] : memref<1x8x128xf32, #tpu.memory_space<vmem>>, vector<1x8x128xf32>
    %1 = vector.shape_cast %0 : vector<1x8x128xf32> to vector<8x128xf32>
    %c0_2 = arith.constant 0 : index
    %c0_3 = arith.constant 0 : index
    %2 = vector.load %arg2[%c0_2, %c0_3] : memref<128x384xf32, #tpu.memory_space<vmem>>, vector<128x384xf32>
    %cst = arith.constant dense<0.000000e+00> : vector<8x384xf32>
    %3 = tpu.matmul %1, %2, %cst {dimension_numbers = #tpu.dot_dimension_numbers<[1], [0], [0], [1], [0, 0, 1, 1], [], []>} : vector<8x128xf32>, vector<128x384xf32>, vector<8x384xf32> -> vector<8x384xf32>
    %4 = vector.shape_cast %3 : vector<8x384xf32> to vector<1x8x384xf32>
    %5 = vector.extract_strided_slice %4 {offsets = [0, 0, 0], sizes = [1, 8, 128], strides = [1, 1, 1]} : vector<1x8x384xf32> to vector<1x8x128xf32>
    %6 = vector.extract_strided_slice %4 {offsets = [0, 0, 128], sizes = [1, 8, 128], strides = [1, 1, 1]} : vector<1x8x384xf32> to vector<1x8x128xf32>
    %7 = vector.extract_strided_slice %4 {offsets = [0, 0, 256], sizes = [1, 8, 128], strides = [1, 1, 1]} : vector<1x8x384xf32> to vector<1x8x128xf32>
    "tpu.trace_start"() <{level = 10 : i32, message = "btc,bsc->bts"}> : () -> ()
    %cst_4 = arith.constant dense<0.000000e+00> : vector<1x8x8xf32>
    %8 = tpu.matmul %5, %6, %cst_4 {dimension_numbers = #tpu.dot_dimension_numbers<[2], [2], [1], [1], [0, 0, 0, 1, 1, 1], [0], [0]>} : vector<1x8x128xf32>, vector<1x8x128xf32>, vector<1x8x8xf32> -> vector<1x8x8xf32>
    "tpu.trace_stop"() : () -> ()
    %cst_5 = arith.constant dense<0xFF800000> : vector<1x8xf32>
    %9 = vector.multi_reduction <maximumf>, %8, %cst_5 [2] : vector<1x8x8xf32> to vector<1x8xf32>
    %10 = vector.shape_cast %9 : vector<1x8xf32> to vector<1x8x1xf32>
    %11 = vector.broadcast %10 : vector<1x8x1xf32> to vector<1x8x8xf32>
    %12 = arith.subf %8, %11 : vector<1x8x8xf32>
    %13 = math.exp %12 : vector<1x8x8xf32>
    %cst_6 = arith.constant dense<0.000000e+00> : vector<1x8xf32>
    %14 = vector.multi_reduction <add>, %13, %cst_6 [2] : vector<1x8x8xf32> to vector<1x8xf32>
    %15 = vector.shape_cast %14 : vector<1x8xf32> to vector<1x8x1xf32>
    %16 = tpu.reciprocal %15 {approx = true} : vector<1x8x1xf32> -> vector<1x8x1xf32>
    %17 = arith.mulf %15, %16 : vector<1x8x1xf32>
    %cst_7 = arith.constant 2.000000e+00 : f32
    %18 = vector.broadcast %cst_7 : f32 to vector<1x8x1xf32>
    %19 = arith.subf %18, %17 : vector<1x8x1xf32>
    %20 = arith.mulf %16, %19 : vector<1x8x1xf32>
    "tpu.trace_start"() <{level = 10 : i32, message = "bts,bsc->btc"}> : () -> ()
    %cst_8 = arith.constant dense<0.000000e+00> : vector<1x8x128xf32>
    %21 = tpu.matmul %13, %7, %cst_8 {dimension_numbers = #tpu.dot_dimension_numbers<[2], [1], [1], [2], [0, 0, 0, 1, 1, 2], [0], [0]>} : vector<1x8x8xf32>, vector<1x8x128xf32>, vector<1x8x128xf32> -> vector<1x8x128xf32>
    "tpu.trace_stop"() : () -> ()
    %22 = vector.broadcast %20 : vector<1x8x1xf32> to vector<1x8x128xf32>
    %23 = arith.mulf %21, %22 : vector<1x8x128xf32>
    %c0_9 = arith.constant 0 : index
    %c0_10 = arith.constant 0 : index
    %c0_11 = arith.constant 0 : index
    %24 = vector.load %arg3[%c0_9, %c0_10, %c0_11] : memref<1x8x128xf32, #tpu.memory_space<vmem>>, vector<1x8x128xf32>
    tpu.vector_store %arg3[%c0_9, %c0_10, %c0_11], %23 {strides = array<i32>} : memref<1x8x128xf32, #tpu.memory_space<vmem>>, vector<1x8x128xf32>,
    return
  }
  func.func @transform_0(%arg0: i32) -> (i32, i32, i32) {
    %c0_i32 = arith.constant 0 : i32
    %c0_i32_0 = arith.constant 0 : i32
    %c0_i32_1 = arith.constant 0 : i32
    return %arg0, %c0_i32, %c0_i32_0 : i32, i32, i32
  }
  func.func @transform_1(%arg0: i32) -> (i32, i32) {
    %c0_i32 = arith.constant 0 : i32
    %c0_i32_0 = arith.constant 0 : i32
    %c0_i32_1 = arith.constant 0 : i32
    return %c0_i32, %c0_i32_0 : i32, i32
  }
  func.func @transform_2(%arg0: i32) -> (i32, i32, i32) {
    %c0_i32 = arith.constant 0 : i32
    %c0_i32_0 = arith.constant 0 : i32
    %c0_i32_1 = arith.constant 0 : i32
    return %arg0, %c0_i32, %c0_i32_0 : i32, i32, i32
  }
}

</mosaic_0001>

<llo_original>
// kernel: tpu_custom_call.1
$region0: #{tpu_custom_call.1}
  #allocation0 [shape = 'u32[]', space=smem, size = 0x4, offset = 0x4, fixed_abs, tag = 'smem constant byte address 0x4 - core index']
  #allocation1 [shape = 'u32[144,128]{1,0:T(1,128)}', space=vmem, size = 0x12000, scoped, tag = 'internal scratch']
  %s0 = inlined_call_operand.hbm [shape: f32[2,8,128], index: 0, kind: input, shape index: {}]
  %s1 = inlined_call_operand.hbm [shape: f32[128,384], index: 1, kind: input, shape index: {}]
  %s2 = inlined_call_operand.hbm [shape: f32[2,8,128], index: 2, kind: output, shape index: {}]
  %s3 = sld [smem:[#allocation0]]
  $region49: #{tpu_custom_call.1} parent=0
    _
  %s5 = ssub.s32 1, %s3
  %s6 = scalar_select 0, %s5, %s3
  $region1: #{tpu_custom_call.1} parent=0
    #allocation2 [shape = 'u8[8192]{0}', space=vmem, size = 0x2000, scoped, tag = 'input window, operand 0']
    #allocation3 [shape = 's32[2]{0}', space=sflag, size = 0x8, scoped, tag = 'scoped memory for tpu_custom_call.1']
    #allocation4 [shape = 's32[2]{0}', space=sflag, size = 0x8, scoped, tag = 'scoped memory for tpu_custom_call.1']
    #allocation5 [shape = 'u8[196608]{0}', space=vmem, size = 0x30000, scoped, tag = 'input window, operand 1, single buffered']
    #allocation6 [shape = 's32[1]{0}', space=sflag, size = 0x4, scoped, tag = 'scoped memory for tpu_custom_call.1']
    #allocation7 [shape = 'u8[8192]{0}', space=vmem, size = 0x2000, scoped, tag = 'output window, operand 0']
    %7 = vsyncpa [#allocation3], 0
    %s8 = scalar_lea.sflag [#allocation3], 1
    %9 = vsyncpa %s8, 0
    %10 = vsyncpa [#allocation6], 0
    %11 = vsyncpa [#allocation4], 0
    %s12 = scalar_lea.sflag [#allocation4], 1
    %13 = vsyncpa %s12, 0
    loop: start=0, step=1, limit=4
    $region2: #{tpu_custom_call.1} parent=1 // loop_pre_header
      _
    $region3: #{tpu_custom_call.1} parent=1 // loop_header
      %s15 = sphi 0, %s19
      %p16 = scmp.ge.s32.totalorder %s15, 4
      %s25 = sphi 0, %s27
      %s28 = sphi 0, %s25
      %s29 = sphi 0, %s28
      %s45 = sphi 0, %s29
      %s49 = sphi 0, %s49
      %s51 = sphi 0, %s49
      %s52 = sphi 0, %s51
      %s66 = sphi 0, %s52
      %s72 = sphi 0, %s74
      %s75 = sphi 0, %s72
      %s76 = sphi 0, %s75
      %s92 = sphi 0, %s76
    $region4: #{tpu_custom_call.1} parent=1 // loop_header_branch
      %18 = sbr.rel (%p16) target = $region8
    $region5: #{tpu_custom_call.1} parent=1 // loop_body
      %s20 = ssub.s32 %s15, 1
      %s21 = ssub.s32 %s15, 2
      %s22 = sadd.s32 %s15, 1
      %s23 = ssub.s32 %s15, %s22
      %p24 = scmp.eq.s32.totalorder %s23, 0
      %s26 = sadd.s32 %s25, 1
      %s27 = scalar_select %p24, %s25, %s26
      %p30 = pneg %p24
      %p31 = scmp.eq.s32.totalorder %s15, 1
      %p32 = por %p30, %p31
      %p33 = scmp.ne.s32.totalorder %s25, %s28
      %p34 = scmp.eq.s32.totalorder %s15, 0
      %p35 = por %p33, %p34
      %p36 = scmp.ne.s32.totalorder %s25, %s28
      %p37 = scmp.eq.s32.totalorder %s20, 1
      %p38 = por %p36, %p37
      %p39 = scmp.ne.s32.totalorder %s28, %s29
      %p40 = scmp.eq.s32.totalorder %s20, 0
      %p41 = por %p39, %p40
      %p42 = scmp.ne.s32.totalorder %s28, %s29
      %p43 = scmp.eq.s32.totalorder %s21, 1
      %p44 = por %p42, %p43
      %p46 = scmp.ne.s32.totalorder %s29, %s45
      %p47 = scmp.eq.s32.totalorder %s21, 0
      %p48 = por %p46, %p47
      %s50 = sadd.s32 %s49, 1
      %p53 = scmp.eq.s32.totalorder %s15, 1
      %p54 = scmp.ne.s32.totalorder %s49, %s51
      %p55 = scmp.eq.s32.totalorder %s15, 0
      %p56 = por %p54, %p55
      %p57 = scmp.ne.s32.totalorder %s49, %s51
      %p58 = scmp.eq.s32.totalorder %s20, 1
      %p59 = por %p57, %p58
      %p60 = scmp.ne.s32.totalorder %s51, %s52
      %p61 = scmp.eq.s32.totalorder %s20, 0
      %p62 = por %p60, %p61
      %p63 = scmp.ne.s32.totalorder %s51, %s52
      %p64 = scmp.eq.s32.totalorder %s21, 1
      %p65 = por %p63, %p64
      %p67 = scmp.ne.s32.totalorder %s52, %s66
      %p68 = scmp.eq.s32.totalorder %s21, 0
      %p69 = por %p67, %p68
      %s70 = ssub.s32 %s15, %s22
      %p71 = scmp.eq.s32.totalorder %s70, 0
      %s73 = sadd.s32 %s72, 1
      %s74 = scalar_select %p71, %s72, %s73
      %p77 = pneg %p71
      %p78 = scmp.eq.s32.totalorder %s15, 1
      %p79 = por %p77, %p78
      %p80 = scmp.ne.s32.totalorder %s72, %s75
      %p81 = scmp.eq.s32.totalorder %s15, 0
      %p82 = por %p80, %p81
      %p83 = scmp.ne.s32.totalorder %s72, %s75
      %p84 = scmp.eq.s32.totalorder %s20, 1
      %p85 = por %p83, %p84
      %p86 = scmp.ne.s32.totalorder %s75, %s76
      %p87 = scmp.eq.s32.totalorder %s20, 0
      %p88 = por %p86, %p87
      %p89 = scmp.ne.s32.totalorder %s75, %s76
      %p90 = scmp.eq.s32.totalorder %s21, 1
      %p91 = por %p89, %p90
      %p93 = scmp.ne.s32.totalorder %s76, %s92
      %p94 = scmp.eq.s32.totalorder %s21, 0
      %p95 = por %p93, %p94
      %p96 = scmp.le.s32.totalorder 1, %s15
      %p97 = scmp.lt.s32.totalorder %s15, 3
      %p98 = pnand %p96, %p97
      %p99 = pneg %p98
      // Predicated region
      $region9: #{tpu_custom_call.1} parent=5 // pred_check
        _
      $region10: #{tpu_custom_call.1} parent=5 // pred_check_branch
        %101 = sbr.rel (%p98) target = $region12
      $region11: #{tpu_custom_call.1} parent=5 // pred_region
        %s102 = ssub.s32 %s15, 1
        // Predicated region
        $region13: #{tpu_custom_call.1} parent=11 // pred_check
          %p103 = pneg %p62
        $region14: #{tpu_custom_call.1} parent=11 // pred_check_branch
          %105 = sbr.rel (%p103) target = $region16
        $region15: #{tpu_custom_call.1} parent=11 // pred_region
          %s107 = ssub.s32 6144, 6144
          %108 = vsyncadd [#allocation6], %s107
          %s109 = sshll.u32 [#allocation5], 4
          %s110 = int_to_ptr.vmem [resolvable:$true] %s109
          %115 = dma.hbm_to_vmem [thread:$0]  %s1, 6144, %s110, [#allocation6], 384, 384, 24
        $region16: #{tpu_custom_call.1} parent=11 // pred_fallthru
          _
      $region12: #{tpu_custom_call.1} parent=5 // pred_fallthru
        _
      %p116 = scmp.lt.s32.totalorder %s15, 2
      // Predicated region
      $region17: #{tpu_custom_call.1} parent=5 // pred_check
        %p117 = pneg %p116
      $region18: #{tpu_custom_call.1} parent=5 // pred_check_branch
        %119 = sbr.rel (%p117) target = $region20
      $region19: #{tpu_custom_call.1} parent=5 // pred_region
        // Predicated region
        $region21: #{tpu_custom_call.1} parent=19 // pred_check
          %p120 = pneg %p35
        $region22: #{tpu_custom_call.1} parent=19 // pred_check_branch
          %122 = sbr.rel (%p120) target = $region24
        $region23: #{tpu_custom_call.1} parent=19 // pred_region
          %s123 = sand.u32 %s25, 1
          %s124 = scalar_lea.sflag [#allocation3], %s123
          %s125 = sand.u32 %s25, 1
          %s126 = smul.addr %s125, 8
          %s127 = scalar_lea.vmem [#allocation2], %s126
          %s129 = ssub.s32 128, 128
          %130 = vsyncadd %s124, %s129
          %s131 = smul.addr %s15, 128
          %s132 = scalar_lea.hbm %s0, %s131
          %s134 = sshll.u32 %s127, 4
          %s135 = int_to_ptr.vmem [resolvable:$true] %s134
          %137 = dma.hbm_to_vmem [thread:$0]  %s132, 128, %s135, %s124
        $region24: #{tpu_custom_call.1} parent=19 // pred_fallthru
          _
      $region20: #{tpu_custom_call.1} parent=5 // pred_fallthru
        _
      %p138 = scmp.le.s32.totalorder 1, %s15
      %p139 = scmp.lt.s32.totalorder %s15, 3
      %p140 = pnand %p138, %p139
      %p141 = pneg %p140
      // Predicated region
      $region25: #{tpu_custom_call.1} parent=5 // pred_check
        _
      $region26: #{tpu_custom_call.1} parent=5 // pred_check_branch
        %143 = sbr.rel (%p140) target = $region28
      $region27: #{tpu_custom_call.1} parent=5 // pred_region
        %s144 = ssub.s32 %s15, 1
        %s145 = sand.u32 %s28, 1
        %s146 = scalar_lea.sflag [#allocation3], %s145
        %s147 = sand.u32 %s28, 1
        %s148 = smul.addr %s147, 8
        %s149 = scalar_lea.vmem [#allocation2], %s148
        // Predicated region
        $region29: #{tpu_custom_call.1} parent=27 // pred_check
          %p150 = pneg %p41
        $region30: #{tpu_custom_call.1} parent=27 // pred_check_branch
          %152 = sbr.rel (%p150) target = $region32
        $region31: #{tpu_custom_call.1} parent=27 // pred_region
          %153 = dma.done %s146, 128
        $region32: #{tpu_custom_call.1} parent=27 // pred_fallthru
          _
        // Predicated region
        $region33: #{tpu_custom_call.1} parent=27 // pred_check
          %p154 = pneg %p62
        $region34: #{tpu_custom_call.1} parent=27 // pred_check_branch
          %156 = sbr.rel (%p154) target = $region36
        $region35: #{tpu_custom_call.1} parent=27 // pred_region
          %157 = dma.done [#allocation6], 6144
        $region36: #{tpu_custom_call.1} parent=27 // pred_fallthru
          _
        %s158 = sand.u32 %s28, 1
        %s159 = scalar_lea.sflag [#allocation3], %s158
        %s160 = sand.u32 %s28, 1
        %s161 = smul.addr %s160, 8
        %s162 = scalar_lea.vmem [#allocation2], %s161
        %p163 = pneg %p41
        %p164 = pneg %p38
        %p165 = pneg %p62
        %p166 = pneg %p59
        %p167 = pneg %p88
        %p168 = pneg %p85
        %s169 = sand.u32 %s75, 1
        %s170 = scalar_lea.sflag [#allocation4], %s169
        %s171 = sand.u32 %s75, 1
        %s172 = smul.addr %s171, 8
        %s173 = scalar_lea.vmem [#allocation7], %s172
        %v174 = vld [vmem:[%s149] sm:$0xff]
        %v175 = vld [vmem:[#allocation5] sm:$0xff]
        %v176 = vld [vmem:[#allocation5 + $0x8] sm:$0xff]
        %v177 = vld [vmem:[#allocation5 + $0x10] sm:$0xff]
        %v178 = vld [vmem:[#allocation5 + $0x18] sm:$0xff]
        %v179 = vld [vmem:[#allocation5 + $0x20] sm:$0xff]
        %v180 = vld [vmem:[#allocation5 + $0x28] sm:$0xff]
        %v181 = vld [vmem:[#allocation5 + $0x30] sm:$0xff]
        %v182 = vld [vmem:[#allocation5 + $0x38] sm:$0xff]
        %v183 = vld [vmem:[#allocation5 + $0x40] sm:$0xff]
        %v184 = vld [vmem:[#allocation5 + $0x48] sm:$0xff]
        %v185 = vld [vmem:[#allocation5 + $0x50] sm:$0xff]
        %v186 = vld [vmem:[#allocation5 + $0x58] sm:$0xff]
        %v187 = vld [vmem:[#allocation5 + $0x60] sm:$0xff]
        %v188 = vld [vmem:[#allocation5 + $0x68] sm:$0xff]
        %v189 = vld [vmem:[#allocation5 + $0x70] sm:$0xff]
        %v190 = vld [vmem:[#allocation5 + $0x78] sm:$0xff]
        %v191 = vld [vmem:[#allocation5 + $0x80] sm:$0xff]
        %v192 = vld [vmem:[#allocation5 + $0x88] sm:$0xff]
        %v193 = vld [vmem:[#allocation5 + $0x90] sm:$0xff]
        %v194 = vld [vmem:[#allocation5 + $0x98] sm:$0xff]
        %v195 = vld [vmem:[#allocation5 + $0xa0] sm:$0xff]
        %v196 = vld [vmem:[#allocation5 + $0xa8] sm:$0xff]
        %v197 = vld [vmem:[#allocation5 + $0xb0] sm:$0xff]
        %v198 = vld [vmem:[#allocation5 + $0xb8] sm:$0xff]
        %v199 = vld [vmem:[#allocation5 + $0xc0] sm:$0xff]
        %v200 = vld [vmem:[#allocation5 + $0xc8] sm:$0xff]
        %v201 = vld [vmem:[#allocation5 + $0xd0] sm:$0xff]
        %v202 = vld [vmem:[#allocation5 + $0xd8] sm:$0xff]
        %v203 = vld [vmem:[#allocation5 + $0xe0] sm:$0xff]
        %v204 = vld [vmem:[#allocation5 + $0xe8] sm:$0xff]
        %v205 = vld [vmem:[#allocation5 + $0xf0] sm:$0xff]
        %v206 = vld [vmem:[#allocation5 + $0xf8] sm:$0xff]
        %v207 = vld [vmem:[#allocation5 + $0x100] sm:$0xff]
        %v208 = vld [vmem:[#allocation5 + $0x108] sm:$0xff]
        %v209 = vld [vmem:[#allocation5 + $0x110] sm:$0xff]
        %v210 = vld [vmem:[#allocation5 + $0x118] sm:$0xff]
        %v211 = vld [vmem:[#allocation5 + $0x120] sm:$0xff]
        %v212 = vld [vmem:[#allocation5 + $0x128] sm:$0xff]
        %v213 = vld [vmem:[#allocation5 + $0x130] sm:$0xff]
        %v214 = vld [vmem:[#allocation5 + $0x138] sm:$0xff]
        %v215 = vld [vmem:[#allocation5 + $0x140] sm:$0xff]
        %v216 = vld [vmem:[#allocation5 + $0x148] sm:$0xff]
        %v217 = vld [vmem:[#allocation5 + $0x150] sm:$0xff]
        %v218 = vld [vmem:[#allocation5 + $0x158] sm:$0xff]
        %v219 = vld [vmem:[#allocation5 + $0x160] sm:$0xff]
        %v220 = vld [vmem:[#allocation5 + $0x168] sm:$0xff]
        %v221 = vld [vmem:[#allocation5 + $0x170] sm:$0xff]
        %v222 = vld [vmem:[#allocation5 + $0x178] sm:$0xff]
        %223 = vmatprep.subr.mxu0 %v176
        %224 = vmatpush1.msra.mxu0 %v175
        %225 = vmatprep.subr.mxu0 %v179
        %226 = vmatpush1.msra.mxu0 %v178
        %227 = vmatprep.subr.mxu0 %v182
        %228 = vmatpush1.msra.mxu0 %v181
        %229 = vmatprep.subr.mxu0 %v185
        %230 = vmatpush1.msra.mxu0 %v184
        %231 = vmatprep.subr.mxu0 %v188
        %232 = vmatpush1.msra.mxu0 %v187
        %233 = vmatprep.subr.mxu0 %v191
        %234 = vmatpush1.msra.mxu0 %v190
        %235 = vmatprep.subr.mxu0 %v194
        %236 = vmatpush1.msra.mxu0 %v193
        %237 = vmatprep.subr.mxu0 %v197
        %238 = vmatpush1.msra.mxu0 %v196
        %239 = vmatprep.subr.mxu0 %v200
        %240 = vmatpush1.msra.mxu0 %v199
        %241 = vmatprep.subr.mxu0 %v203
        %242 = vmatpush1.msra.mxu0 %v202
        %243 = vmatprep.subr.mxu0 %v206
        %244 = vmatpush1.msra.mxu0 %v205
        %245 = vmatprep.subr.mxu0 %v209
        %246 = vmatpush1.msra.mxu0 %v208
        %247 = vmatprep.subr.mxu0 %v212
        %248 = vmatpush1.msra.mxu0 %v211
        %249 = vmatprep.subr.mxu0 %v215
        %250 = vmatpush1.msra.mxu0 %v214
        %251 = vmatprep.subr.mxu0 %v218
        %252 = vmatpush1.msra.mxu0 %v217
        %253 = vmatprep.subr.mxu0 %v221
        %254 = vmatpush1.msra.mxu0 %v220
        %255 = vmatprep.subr.mxu0 0.0
        %256 = vmatpush1.msra.mxu0 0.0
        %257 = vmatprep.subr.mxu0 0.0
        %258 = vmatpush1.msra.mxu0 0.0
        %259 = vmatprep.subr.mxu0 0.0
        %260 = vmatpush1.msra.mxu0 0.0
        %261 = vmatprep.subr.mxu0 0.0
        %262 = vmatpush1.msra.mxu0 0.0
        %263 = vmatprep.subr.mxu0 0.0
        %264 = vmatpush1.msra.mxu0 0.0
        %265 = vmatprep.subr.mxu0 0.0
        %266 = vmatpush1.msra.mxu0 0.0
        %267 = vmatprep.subr.mxu0 0.0
        %268 = vmatpush1.msra.mxu0 0.0
        %269 = vmatprep.subr.mxu0 0.0
        %270 = vmatpush1.msra.mxu0 0.0
        %271 = vmatprep.subr.mxu0 0.0
        %272 = vmatpush1.msra.mxu0 0.0
        %273 = vmatprep.subr.mxu0 0.0
        %274 = vmatpush1.msra.mxu0 0.0
        %275 = vmatprep.subr.mxu0 0.0
        %276 = vmatpush1.msra.mxu0 0.0
        %277 = vmatprep.subr.mxu0 0.0
        %278 = vmatpush1.msra.mxu0 0.0
        %279 = vmatprep.subr.mxu0 0.0
        %280 = vmatpush1.msra.mxu0 0.0
        %281 = vmatprep.subr.mxu0 0.0
        %282 = vmatpush1.msra.mxu0 0.0
        %283 = vmatprep.subr.mxu0 0.0
        %284 = vmatpush1.msra.mxu0 0.0
        %285 = vmatprep.subr.mxu0 0.0
        %286 = vmatpush1.msra.mxu0 0.0
        %287 = vmatprep.mubr.f32.mxu0 0.0
        %288 = vmatmul.mubr.f32.gmra.mrb[0].mxu0 %v174
        %v289 = vpop.f32.mrb[0].mxu0
        %v290 = vadd.f32 0.0, %v289
        %v291 = vpop.f32.mrb[0].mxu0
        %v292 = vadd.f32 0.0, %v291
        %293 = vdwg.mxu0
        %294 = vmatprep.subr.mxu0 0.0
        %295 = vmatpush1.msra.mxu0 %v177
        %296 = vmatprep.subr.mxu0 0.0
        %297 = vmatpush1.msra.mxu0 %v180
        %298 = vmatprep.subr.mxu0 0.0
        %299 = vmatpush1.msra.mxu0 %v183
        %300 = vmatprep.subr.mxu0 0.0
        %301 = vmatpush1.msra.mxu0 %v186
        %302 = vmatprep.subr.mxu0 0.0
        %303 = vmatpush1.msra.mxu0 %v189
        %304 = vmatprep.subr.mxu0 0.0
        %305 = vmatpush1.msra.mxu0 %v192
        %306 = vmatprep.subr.mxu0 0.0
        %307 = vmatpush1.msra.mxu0 %v195
        %308 = vmatprep.subr.mxu0 0.0
        %309 = vmatpush1.msra.mxu0 %v198
        %310 = vmatprep.subr.mxu0 0.0
        %311 = vmatpush1.msra.mxu0 %v201
        %312 = vmatprep.subr.mxu0 0.0
        %313 = vmatpush1.msra.mxu0 %v204
        %314 = vmatprep.subr.mxu0 0.0
        %315 = vmatpush1.msra.mxu0 %v207
        %316 = vmatprep.subr.mxu0 0.0
        %317 = vmatpush1.msra.mxu0 %v210
        %318 = vmatprep.subr.mxu0 0.0
        %319 = vmatpush1.msra.mxu0 %v213
        %320 = vmatprep.subr.mxu0 0.0
        %321 = vmatpush1.msra.mxu0 %v216
        %322 = vmatprep.subr.mxu0 0.0
        %323 = vmatpush1.msra.mxu0 %v219
        %324 = vmatprep.subr.mxu0 0.0
        %325 = vmatpush1.msra.mxu0 %v222
        %326 = vmatprep.subr.mxu0 0.0
        %327 = vmatpush1.msra.mxu0 0.0
        %328 = vmatprep.subr.mxu0 0.0
        %329 = vmatpush1.msra.mxu0 0.0
        %330 = vmatprep.subr.mxu0 0.0
        %331 = vmatpush1.msra.mxu0 0.0
        %332 = vmatprep.subr.mxu0 0.0
        %333 = vmatpush1.msra.mxu0 0.0
        %334 = vmatprep.subr.mxu0 0.0
        %335 = vmatpush1.msra.mxu0 0.0
        %336 = vmatprep.subr.mxu0 0.0
        %337 = vmatpush1.msra.mxu0 0.0
        %338 = vmatprep.subr.mxu0 0.0
        %339 = vmatpush1.msra.mxu0 0.0
        %340 = vmatprep.subr.mxu0 0.0
        %341 = vmatpush1.msra.mxu0 0.0
        %342 = vmatprep.subr.mxu0 0.0
        %343 = vmatpush1.msra.mxu0 0.0
        %344 = vmatprep.subr.mxu0 0.0
        %345 = vmatpush1.msra.mxu0 0.0
        %346 = vmatprep.subr.mxu0 0.0
        %347 = vmatpush1.msra.mxu0 0.0
        %348 = vmatprep.subr.mxu0 0.0
        %349 = vmatpush1.msra.mxu0 0.0
        %350 = vmatprep.subr.mxu0 0.0
        %351 = vmatpush1.msra.mxu0 0.0
        %352 = vmatprep.subr.mxu0 0.0
        %353 = vmatpush1.msra.mxu0 0.0
        %354 = vmatprep.subr.mxu0 0.0
        %355 = vmatpush1.msra.mxu0 0.0
        %356 = vmatprep.subr.mxu0 0.0
        %357 = vmatpush1.msra.mxu0 0.0
        %358 = vmatprep.mubr.f32.mxu0 0.0
        %359 = vmatmul.mubr.f32.gmra.mrb[0].mxu0 %v174
        %v360 = vpop.f32.mrb[0].mxu0
        %v361 = vadd.f32 0.0, %v360
        %v362 = vpop.f32.mrb[0].mxu0
        %363 = vdwg.mxu0
        %364 = vmatprep.subr.mxu0 0.0
        %365 = vmatpush1.xpose.msra.mxu0 %v292
        %366 = vmatprep.subr.mxu0 0.0
        %367 = vmatpush1.xpose.msra.mxu0 0.0
        %368 = vmatprep.subr.mxu0 0.0
        %369 = vmatpush1.xpose.msra.mxu0 0.0
        %370 = vmatprep.subr.mxu0 0.0
        %371 = vmatpush1.xpose.msra.mxu0 0.0
        %372 = vmatprep.subr.mxu0 0.0
        %373 = vmatpush1.xpose.msra.mxu0 0.0
        %374 = vmatprep.subr.mxu0 0.0
        %375 = vmatpush1.xpose.msra.mxu0 0.0
        %376 = vmatprep.subr.mxu0 0.0
        %377 = vmatpush1.xpose.msra.mxu0 0.0
        %378 = vmatprep.subr.mxu0 0.0
        %379 = vmatpush1.xpose.msra.mxu0 0.0
        %380 = vmatprep.subr.mxu0 0.0
        %381 = vmatpush1.xpose.msra.mxu0 0.0
        %382 = vmatprep.subr.mxu0 0.0
        %383 = vmatpush1.xpose.msra.mxu0 0.0
        %384 = vmatprep.subr.mxu0 0.0
        %385 = vmatpush1.xpose.msra.mxu0 0.0
        %386 = vmatprep.subr.mxu0 0.0
        %387 = vmatpush1.xpose.msra.mxu0 0.0
        %388 = vmatprep.subr.mxu0 0.0
        %389 = vmatpush1.xpose.msra.mxu0 0.0
        %390 = vmatprep.subr.mxu0 0.0
        %391 = vmatpush1.xpose.msra.mxu0 0.0
        %392 = vmatprep.subr.mxu0 0.0
        %393 = vmatpush1.xpose.msra.mxu0 0.0
        %394 = vmatprep.subr.mxu0 0.0
        %395 = vmatpush1.xpose.msra.mxu0 0.0
        %396 = vmatprep.subr.mxu0 0.0
        %397 = vmatpush1.xpose.msra.mxu0 0.0
        %398 = vmatprep.subr.mxu0 0.0
        %399 = vmatpush1.xpose.msra.mxu0 0.0
        %400 = vmatprep.subr.mxu0 0.0
        %401 = vmatpush1.xpose.msra.mxu0 0.0
        %402 = vmatprep.subr.mxu0 0.0
        %403 = vmatpush1.xpose.msra.mxu0 0.0
        %404 = vmatprep.subr.mxu0 0.0
        %405 = vmatpush1.xpose.msra.mxu0 0.0
        %406 = vmatprep.subr.mxu0 0.0
        %407 = vmatpush1.xpose.msra.mxu0 0.0
        %408 = vmatprep.subr.mxu0 0.0
        %409 = vmatpush1.xpose.msra.mxu0 0.0
        %410 = vmatprep.subr.mxu0 0.0
        %411 = vmatpush1.xpose.msra.mxu0 0.0
        %412 = vmatprep.subr.mxu0 0.0
        %413 = vmatpush1.xpose.msra.mxu0 0.0
        %414 = vmatprep.subr.mxu0 0.0
        %415 = vmatpush1.xpose.msra.mxu0 0.0
        %416 = vmatprep.subr.mxu0 0.0
        %417 = vmatpush1.xpose.msra.mxu0 0.0
        %418 = vmatprep.subr.mxu0 0.0
        %419 = vmatpush1.xpose.msra.mxu0 0.0
        %420 = vmatprep.subr.mxu0 0.0
        %421 = vmatpush1.xpose.msra.mxu0 0.0
        %422 = vmatprep.subr.mxu0 0.0
        %423 = vmatpush1.xpose.msra.mxu0 0.0
        %424 = vmatprep.subr.mxu0 0.0
        %425 = vmatpush1.xpose.msra.mxu0 0.0
        %426 = vmatprep.subr.mxu0 0.0
        %427 = vmatpush1.xpose.msra.mxu0 0.0
        %428 = vmatprep.mubr.f32.mxu0 0.0
        %429 = vmatmul.mubr.f32.gmra.mrb[0].mxu0 %v290
        %v430 = vpop.f32.mrb[0].mxu0
        %v431 = vadd.f32 0.0, %v430
        %v432 = vpop.f32.mrb[0].mxu0
        %433 = vdwg.mxu0
        %vm434 = vcmask 64512
        %v435 = vsel %vm434, %v431, -inf
        %436 = vmax.xlane.f32.xlu0 %v435
        %v437 = vpop.xlane.xlu0 %436
        %v438 = vsub.f32 %v431, %v437
        %v439 = vmul.f32 %v438, 1.442695
        %v440 = vpow.pop %v439
        %v441 = vsel %vm434, %v440, 0.0
        %442 = vadd.xlane.f32.xlu0 %v441
        %v443 = vpop.xlane.xlu0 %442
        %v444 = vrcp.pop %v443
        %v445 = vmul.f32 %v443, %v444
        %v446 = vsub.f32 2.0, %v445
        %v447 = vmul.f32 %v444, %v446
        %v449 = vsel %vm434, %v440, 0
        %451 = vmatprep.subr.mxu0 0.0
        %452 = vmatpush1.msra.mxu0 %v361
        %453 = vmatprep.subr.mxu0 0.0
        %454 = vmatpush1.msra.mxu0 0.0
        %455 = vmatprep.subr.mxu0 0.0
        %456 = vmatpush1.msra.mxu0 0.0
        %457 = vmatprep.subr.mxu0 0.0
        %458 = vmatpush1.msra.mxu0 0.0
        %459 = vmatprep.subr.mxu0 0.0
        %460 = vmatpush1.msra.mxu0 0.0
        %461 = vmatprep.subr.mxu0 0.0
        %462 = vmatpush1.msra.mxu0 0.0
        %463 = vmatprep.subr.mxu0 0.0
        %464 = vmatpush1.msra.mxu0 0.0
        %465 = vmatprep.subr.mxu0 0.0
        %466 = vmatpush1.msra.mxu0 0.0
        %467 = vmatprep.subr.mxu0 0.0
        %468 = vmatpush1.msra.mxu0 0.0
        %469 = vmatprep.subr.mxu0 0.0
        %470 = vmatpush1.msra.mxu0 0.0
        %471 = vmatprep.subr.mxu0 0.0
        %472 = vmatpush1.msra.mxu0 0.0
        %473 = vmatprep.subr.mxu0 0.0
        %474 = vmatpush1.msra.mxu0 0.0
        %475 = vmatprep.subr.mxu0 0.0
        %476 = vmatpush1.msra.mxu0 0.0
        %477 = vmatprep.subr.mxu0 0.0
        %478 = vmatpush1.msra.mxu0 0.0
        %479 = vmatprep.subr.mxu0 0.0
        %480 = vmatpush1.msra.mxu0 0.0
        %481 = vmatprep.subr.mxu0 0.0
        %482 = vmatpush1.msra.mxu0 0.0
        %483 = vmatprep.subr.mxu0 0.0
        %484 = vmatpush1.msra.mxu0 0.0
        %485 = vmatprep.subr.mxu0 0.0
        %486 = vmatpush1.msra.mxu0 0.0
        %487 = vmatprep.subr.mxu0 0.0
        %488 = vmatpush1.msra.mxu0 0.0
        %489 = vmatprep.subr.mxu0 0.0
        %490 = vmatpush1.msra.mxu0 0.0
        %491 = vmatprep.subr.mxu0 0.0
        %492 = vmatpush1.msra.mxu0 0.0
        %493 = vmatprep.subr.mxu0 0.0
        %494 = vmatpush1.msra.mxu0 0.0
        %495 = vmatprep.subr.mxu0 0.0
        %496 = vmatpush1.msra.mxu0 0.0
        %497 = vmatprep.subr.mxu0 0.0
        %498 = vmatpush1.msra.mxu0 0.0
        %499 = vmatprep.subr.mxu0 0.0
        %500 = vmatpush1.msra.mxu0 0.0
        %501 = vmatprep.subr.mxu0 0.0
        %502 = vmatpush1.msra.mxu0 0.0
        %503 = vmatprep.subr.mxu0 0.0
        %504 = vmatpush1.msra.mxu0 0.0
        %505 = vmatprep.subr.mxu0 0.0
        %506 = vmatpush1.msra.mxu0 0.0
        %507 = vmatprep.subr.mxu0 0.0
        %508 = vmatpush1.msra.mxu0 0.0
        %509 = vmatprep.subr.mxu0 0.0
        %510 = vmatpush1.msra.mxu0 0.0
        %511 = vmatprep.subr.mxu0 0.0
        %512 = vmatpush1.msra.mxu0 0.0
        %513 = vmatprep.subr.mxu0 0.0
        %514 = vmatpush1.msra.mxu0 0.0
        %515 = vmatprep.mubr.f32.mxu0 0.0
        %516 = vmatmul.mubr.f32.gmra.mrb[0].mxu0 %v449
        %v517 = vpop.f32.mrb[0].mxu0
        %v518 = vadd.f32 0.0, %v517
        %v519 = vpop.f32.mrb[0].mxu0
        %520 = vdwg.mxu0
        %v521 = vmul.f32 %v518, %v447
        %522 = vst [vmem:[%s173] sm:$0xff] %v521
        %s523 = sand.u32 %s75, 1
        %s524 = scalar_lea.sflag [#allocation4], %s523
        %s525 = sand.u32 %s75, 1
        %s526 = smul.addr %s525, 8
        %s527 = scalar_lea.vmem [#allocation7], %s526
        // Predicated region
        $region37: #{tpu_custom_call.1} parent=27 // pred_check
          %p528 = pneg %p85
        $region38: #{tpu_custom_call.1} parent=27 // pred_check_branch
          %530 = sbr.rel (%p528) target = $region40
        $region39: #{tpu_custom_call.1} parent=27 // pred_region
          %s532 = ssub.s32 128, 128
          %533 = vsyncadd %s524, %s532
          %s534 = smul.addr %s20, 128
          %s535 = scalar_lea.hbm %s2, %s534
          %s537 = sshll.u32 %s527, 4
          %s538 = int_to_ptr.vmem [resolvable:$true] %s537
          %540 = dma.vmem_to_hbm [thread:$0]  %s538, 128, %s535, %s524
        $region40: #{tpu_custom_call.1} parent=27 // pred_fallthru
          _
      $region28: #{tpu_custom_call.1} parent=5 // pred_fallthru
        _
      %p541 = scmp.le.s32.totalorder 2, %s15
      // Predicated region
      $region41: #{tpu_custom_call.1} parent=5 // pred_check
        %p542 = pneg %p541
      $region42: #{tpu_custom_call.1} parent=5 // pred_check_branch
        %544 = sbr.rel (%p542) target = $region44
      $region43: #{tpu_custom_call.1} parent=5 // pred_region
        %s545 = ssub.s32 %s15, 2
        // Predicated region
        $region45: #{tpu_custom_call.1} parent=43 // pred_check
          %p546 = pneg %p91
        $region46: #{tpu_custom_call.1} parent=43 // pred_check_branch
          %548 = sbr.rel (%p546) target = $region48
        $region47: #{tpu_custom_call.1} parent=43 // pred_region
          %s549 = sand.u32 %s76, 1
          %s550 = scalar_lea.sflag [#allocation4], %s549
          %s551 = sand.u32 %s76, 1
          %s552 = smul.addr %s551, 8
          %s553 = scalar_lea.vmem [#allocation7], %s552
          %554 = dma.done %s550, 128
        $region48: #{tpu_custom_call.1} parent=43 // pred_fallthru
          _
      $region44: #{tpu_custom_call.1} parent=5 // pred_fallthru
        _
    $region6: #{tpu_custom_call.1} parent=1 // loop_footer
      %s19 = sadd.s32 1, %s15
    $region7: #{tpu_custom_call.1} parent=1 // loop_footer_branch
      %14 = sbr.rel target = $region3
    $region8: #{tpu_custom_call.1} parent=1 // loop_exit
      _
    %555 = vsyncpa [#allocation3], 1
    %s556 = scalar_lea.sflag [#allocation3], 1
    %557 = vsyncpa %s556, 1
    %558 = vsyncpa [#allocation6], 1
    %559 = vsyncpa [#allocation4], 1
    %s560 = scalar_lea.sflag [#allocation4], 1
    %561 = vsyncpa %s560, 1

</llo_original>
